<compile_context>
chip_gen: v5e
topology: v5e:2x2
jax: 0.10.0
libtpu: 0.0.40
codegen_flags: <defaults>
</compile_context>

<pallas_src>
import functools

import jax
import jax.numpy as jnp
from jax.experimental import pallas as pl
from jax.experimental.pallas import tpu as pltpu


# ---------------------------------------------------------------------------
# In-kernel helpers
# ---------------------------------------------------------------------------
def _mlp_bf16(x, w1, b1, w2, b2):
    """Per-pixel 2-layer MLP; bf16 MXU operands, f32 accumulate, f32 bias/ReLU."""
    h = jnp.dot(x.astype(jnp.bfloat16), w1, preferred_element_type=jnp.float32) + b1
    h = jnp.maximum(h, 0.0)
    return jnp.dot(h.astype(jnp.bfloat16), w2, preferred_element_type=jnp.float32) + b2


# ---------------------------------------------------------------------------
# Fused InvBlock kernels (forward / reverse)
#   Weight args: f-subnet (w1,b1,w2,b2) and fused r/y subnet (w1,b1,w2,b2) where the
#   fused second layer is block-diagonal so the output tile is [s1 || t1].
# ---------------------------------------------------------------------------
def _invblock_fwd_kernel(x1_ref, x2_ref,
                         fw1_ref, fb1_ref, fw2_ref, fb2_ref,
                         ryw1_ref, ryb1_ref, ryw2_ref, ryb2_ref,
                         y1_ref, y2_ref, *, clamp, y_dim):
    x1 = x1_ref[...]
    x2 = x2_ref[...]
    t2 = _mlp_bf16(x2, fw1_ref[...], fb1_ref[...], fw2_ref[...], fb2_ref[...])
    y1 = x1 + t2
    st = _mlp_bf16(y1, ryw1_ref[...], ryb1_ref[...], ryw2_ref[...], ryb2_ref[...])
    s1 = st[:, :y_dim]
    t1 = st[:, y_dim:]
    gate = jnp.exp(clamp * jnp.tanh(0.5 * s1))      # == exp(clamp*2*(sigmoid(s)-0.5))
    y2 = gate * x2 + t1
    y1_ref[...] = y1.astype(y1_ref.dtype)
    y2_ref[...] = y2.astype(y2_ref.dtype)


def _invblock_rev_kernel(x1_ref, x2_ref,
                         fw1_ref, fb1_ref, fw2_ref, fb2_ref,
                         ryw1_ref, ryb1_ref, ryw2_ref, ryb2_ref,
                         y1_ref, y2_ref, *, clamp, y_dim):
    x1 = x1_ref[...]
    x2 = x2_ref[...]
    st = _mlp_bf16(x1, ryw1_ref[...], ryb1_ref[...], ryw2_ref[...], ryb2_ref[...])
    s1 = st[:, :y_dim]
    t1 = st[:, y_dim:]
    inv_gate = jnp.exp(-clamp * jnp.tanh(0.5 * s1))  # multiply instead of divide
    y2 = (x2 - t1) * inv_gate
    t2 = _mlp_bf16(y2, fw1_ref[...], fb1_ref[...], fw2_ref[...], fb2_ref[...])
    y1 = x1 - t2
    y1_ref[...] = y1.astype(y1_ref.dtype)
    y2_ref[...] = y2.astype(y2_ref.dtype)


# ---------------------------------------------------------------------------
# Weight packing (bf16 matmul operands, f32 biases, fused r/y)
# ---------------------------------------------------------------------------
def _pack_weights(params):
    f, r, y = params["f"], params["r"], params["y"]
    cy = r["w2"].shape[1]
    hr, hy = r["w2"].shape[0], y["w2"].shape[0]

    fw1 = f["w1"].astype(jnp.bfloat16)
    fb1 = f["b1"].reshape(1, -1).astype(jnp.float32)
    fw2 = f["w2"].astype(jnp.bfloat16)
    fb2 = f["b2"].reshape(1, -1).astype(jnp.float32)

    # Fused r/y: first layer concatenated along the output dim; second layer
    # block-diagonal so one matmul yields [s1 || t1] lane-dense.
    ryw1 = jnp.concatenate([r["w1"], y["w1"]], axis=1).astype(jnp.bfloat16)
    ryb1 = jnp.concatenate([r["b1"], y["b1"]]).reshape(1, -1).astype(jnp.float32)
    ryw2 = jnp.zeros((hr + hy, 2 * cy), jnp.float32)
    ryw2 = ryw2.at[:hr, :cy].set(r["w2"]).at[hr:, cy:].set(y["w2"]).astype(jnp.bfloat16)
    ryb2 = jnp.concatenate([r["b2"], y["b2"]]).reshape(1, -1).astype(jnp.float32)
    return [fw1, fb1, fw2, fb2, ryw1, ryb1, ryw2, ryb2]


def _select_tile(m, tm_max):
    """Row tile: multiple of 8, >=2 grid steps when M allows (v7x megacore),
    preferring a divisor of M so no pad copy is needed."""
    cap = min(tm_max, -(-m // 2)) if m >= 16 else min(tm_max, m)
    cap = max(8, ((cap + 7) // 8) * 8)
    if m % 8 == 0:
        for cand in range(cap, 7, -8):
            if m % cand == 0:
                return cand
    return cap


# ---------------------------------------------------------------------------
# 2-D entry point: activations already in [M, C] channels-last layout.
# ---------------------------------------------------------------------------
def invblock_pallas_2d(params, x1, x2, *, rev=False, clamp=2.0, tm_max=2048):
    m, cx = x1.shape
    m2, cy = x2.shape
    assert m == m2
    hidden = params["f"]["w1"].shape[1]

    w_args = _pack_weights(params)
    w_specs = [pl.BlockSpec(a.shape, lambda i: (0, 0)) for a in w_args]

    tm = _select_tile(m, tm_max)
    grid_m = pl.cdiv(m, tm)
    mp = grid_m * tm
    if mp != m:
        # TODO(synk): only hit when no 8-aligned divisor tile exists; tail rows pass
        # through the kernel (gate(0)=1, no inf/NaN) and are sliced off below.
        x1 = jnp.pad(x1, ((0, mp - m), (0, 0)))
        x2 = jnp.pad(x2, ((0, mp - m), (0, 0)))

    kernel = functools.partial(
        _invblock_rev_kernel if rev else _invblock_fwd_kernel,
        clamp=float(clamp), y_dim=int(cy))

    flops_row = 2 * hidden * (cx + cy) + 4 * hidden * (cx + 2 * cy)
    cost = pl.CostEstimate(
        flops=int(m) * int(flops_row),
        transcendentals=int(m) * 2 * int(cy),
        bytes_accessed=int(m) * (int(cx) + int(cy)) * 4 * 2)

    io_block_bytes = 4 * tm * (cx + cy) * 4   # dbl-buffered f32 in+out tiles
    vmem_limit = min(max(32 << 20, 2 * io_block_bytes + (16 << 20)), 56 << 20)

    y1_2d, y2_2d = pl.pallas_call(
        kernel,
        out_shape=(jax.ShapeDtypeStruct((mp, cx), jnp.float32),
                   jax.ShapeDtypeStruct((mp, cy), jnp.float32)),
        grid_spec=pltpu.PrefetchScalarGridSpec(
            num_scalar_prefetch=0,
            grid=(grid_m,),
            in_specs=[pl.BlockSpec((tm, cx), lambda i: (i, 0)),
                      pl.BlockSpec((tm, cy), lambda i: (i, 0))] + w_specs,
            out_specs=[pl.BlockSpec((tm, cx), lambda i: (i, 0)),
                       pl.BlockSpec((tm, cy), lambda i: (i, 0))],
        ),
        compiler_params=pltpu.CompilerParams(
            dimension_semantics=("parallel",),
            vmem_limit_bytes=int(vmem_limit)),
        cost_estimate=cost,
    )(x1, x2, *w_args)

    if mp != m:
        y1_2d, y2_2d = y1_2d[:m], y2_2d[:m]
    return y1_2d, y2_2d


# ---------------------------------------------------------------------------
# NCHW wrapper (matches the PyTorch module's interface): one transpose per side.
# ---------------------------------------------------------------------------
def invblock_pallas(params, x1_nchw, x2_nchw, *, rev=False, clamp=2.0, tm_max=2048):
    n, cx, h, w = x1_nchw.shape
    n2, cy, h2, w2 = x2_nchw.shape
    assert (n, h, w) == (n2, h2, w2)
    m = n * h * w

    x1 = jnp.transpose(x1_nchw, (0, 2, 3, 1)).reshape(m, cx)
    x2 = jnp.transpose(x2_nchw, (0, 2, 3, 1)).reshape(m, cy)

    y1_2d, y2_2d = invblock_pallas_2d(params, x1, x2, rev=rev, clamp=clamp,
                                      tm_max=tm_max)

    y1 = y1_2d.reshape(n, h, w, cx).transpose(0, 3, 1, 2)
    y2 = y2_2d.reshape(n, h, w, cy).transpose(0, 3, 1, 2)
    return y1, y2


# ---------------------------------------------------------------------------
# Parameter init (deterministic)
# ---------------------------------------------------------------------------
def init_invblock_params(key, x_dim, y_dim, hidden):
    def subnet_params(k, cin, cout):
        k1, k2, k3, k4 = jax.random.split(k, 4)
        return dict(
            w1=0.1 * jax.random.normal(k1, (cin, hidden), jnp.float32),
            b1=0.1 * jax.random.normal(k2, (hidden,), jnp.float32),
            w2=0.1 * jax.random.normal(k3, (hidden, cout), jnp.float32),
            b2=0.1 * jax.random.normal(k4, (cout,), jnp.float32),
        )
    kf, kr, ky = jax.random.split(key, 3)
    return dict(
        f=subnet_params(kf, y_dim, x_dim),   # f: y_dim -> x_dim
        r=subnet_params(kr, x_dim, y_dim),   # r: x_dim -> y_dim
        y=subnet_params(ky, x_dim, y_dim),   # y: x_dim -> y_dim
    )


# ---------------------------------------------------------------------------
# Pure-JAX f32 reference (matches PyTorch semantics) for the correctness check
# ---------------------------------------------------------------------------
def invblock_reference(params, x1, x2, *, rev=False, clamp=2.0):
    hi = jax.lax.Precision.HIGHEST

    def subnet(p, x):
        h = jnp.einsum("nchw,cd->ndhw", x, p["w1"], precision=hi)
        h = jnp.maximum(h + p["b1"][None, :, None, None], 0.0)
        o = jnp.einsum("ndhw,do->nohw", h, p["w2"], precision=hi)
        return o + p["b2"][None, :, None, None]

    def gate(s):
        return jnp.exp(clamp * 2.0 * (jax.nn.sigmoid(s) - 0.5))

    if not rev:
        t2 = subnet(params["f"], x2)
        y1 = x1 + t2
        s1, t1 = subnet(params["r"], y1), subnet(params["y"], y1)
        y2 = gate(s1) * x2 + t1
    else:
        s1, t1 = subnet(params["r"], x1), subnet(params["y"], x1)
        y2 = (x2 - t1) / gate(s1)
        t2 = subnet(params["f"], y2)
        y1 = x1 - t2
    return y1, y2


if __name__ == "__main__":
    key = jax.random.PRNGKey(0)
    key, k1, k2 = jax.random.split(key, 3)

    # Small shapes consistent with InvBlock defaults: x_dim=128, y_dim=64.
    N, H, W = 2, 8, 8
    x_dim, y_dim, hidden = 128, 64, 128
    clamp = 2.0

    x1 = jax.random.normal(k1, (N, x_dim, H, W), jnp.float32)
    x2 = jax.random.normal(k2, (N, y_dim, H, W), jnp.float32)
    params = init_invblock_params(key, x_dim, y_dim, hidden)

    fwd = jax.jit(lambda p, a, b: invblock_pallas(p, a, b, rev=False, clamp=clamp))
    bwd = jax.jit(lambda p, a, b: invblock_pallas(p, a, b, rev=True, clamp=clamp))

    # Tolerance reflects bf16 MXU operands (f32 accumulate) vs. the f32 reference.
    tol = dict(atol=5e-2, rtol=5e-2)

    # Forward (rev=False)
    y1, y2 = jax.block_until_ready(fwd(params, x1, x2))
    r1, r2 = invblock_reference(params, x1, x2, rev=False, clamp=clamp)
    assert y1.shape == (N, x_dim, H, W) and y2.shape == (N, y_dim, H, W)
    assert jnp.allclose(y1, r1, **tol), float(jnp.max(jnp.abs(y1 - r1)))
    assert jnp.allclose(y2, r2, **tol), float(jnp.max(jnp.abs(y2 - r2)))

    # Reverse (rev=True) on the forward outputs.
    z1, z2 = jax.block_until_ready(bwd(params, y1, y2))
    q1, q2 = invblock_reference(params, y1, y2, rev=True, clamp=clamp)
    assert jnp.allclose(z1, q1, **tol), float(jnp.max(jnp.abs(z1 - q1)))
    assert jnp.allclose(z2, q2, **tol), float(jnp.max(jnp.abs(z2 - q2)))

    print("KERNEL_OK")
</pallas_src>

<mosaic_0001>
module attributes {stable_mosaic.version = 11 : i64} {
  func.func @_invblock_fwd_kernel(%arg0: i32, %arg1: memref<64x128xf32, #tpu.memory_space<vmem>>, %arg2: memref<64x64xf32, #tpu.memory_space<vmem>>, %arg3: memref<64x128xbf16, #tpu.memory_space<vmem>>, %arg4: memref<1x128xf32, #tpu.memory_space<vmem>>, %arg5: memref<128x128xbf16, #tpu.memory_space<vmem>>, %arg6: memref<1x128xf32, #tpu.memory_space<vmem>>, %arg7: memref<128x256xbf16, #tpu.memory_space<vmem>>, %arg8: memref<1x256xf32, #tpu.memory_space<vmem>>, %arg9: memref<256x128xbf16, #tpu.memory_space<vmem>>, %arg10: memref<1x128xf32, #tpu.memory_space<vmem>>, %arg11: memref<64x128xf32, #tpu.memory_space<vmem>>, %arg12: memref<64x64xf32, #tpu.memory_space<vmem>>) attributes {dimension_semantics = [#tpu.dimension_semantics<parallel>], iteration_bounds = array<i64: 2>, scalar_prefetch = 0 : i64, scratch_operands = 0 : i64, tpu.core_type = #tpu.core_type<tc>, window_params = [{transform_indices = @transform_0, window_bounds = array<i64: 64, 128>}, {transform_indices = @transform_1, window_bounds = array<i64: 64, 64>}, {pipeline_mode = #tpu.pipeline_mode<synchronous>, transform_indices = @transform_2, window_bounds = array<i64: 64, 128>}, {pipeline_mode = #tpu.pipeline_mode<synchronous>, transform_indices = @transform_3, window_bounds = array<i64: 1, 128>}, {pipeline_mode = #tpu.pipeline_mode<synchronous>, transform_indices = @transform_4, window_bounds = array<i64: 128, 128>}, {pipeline_mode = #tpu.pipeline_mode<synchronous>, transform_indices = @transform_5, window_bounds = array<i64: 1, 128>}, {pipeline_mode = #tpu.pipeline_mode<synchronous>, transform_indices = @transform_6, window_bounds = array<i64: 128, 256>}, {pipeline_mode = #tpu.pipeline_mode<synchronous>, transform_indices = @transform_7, window_bounds = array<i64: 1, 256>}, {pipeline_mode = #tpu.pipeline_mode<synchronous>, transform_indices = @transform_8, window_bounds = array<i64: 256, 128>}, {pipeline_mode = #tpu.pipeline_mode<synchronous>, transform_indices = @transform_9, window_bounds = array<i64: 1, 128>}, {transform_indices = @transform_10, window_bounds = array<i64: 64, 128>}, {transform_indices = @transform_11, window_bounds = array<i64: 64, 64>}]} {
    %c0 = arith.constant 0 : index
    %c0_0 = arith.constant 0 : index
    %0 = vector.load %arg1[%c0, %c0_0] : memref<64x128xf32, #tpu.memory_space<vmem>>, vector<64x128xf32>
    %c0_1 = arith.constant 0 : index
    %c0_2 = arith.constant 0 : index
    %1 = vector.load %arg2[%c0_1, %c0_2] : memref<64x64xf32, #tpu.memory_space<vmem>>, vector<64x64xf32>
    %c0_3 = arith.constant 0 : index
    %c0_4 = arith.constant 0 : index
    %2 = vector.load %arg3[%c0_3, %c0_4] : memref<64x128xbf16, #tpu.memory_space<vmem>>, vector<64x128xbf16>
    %c0_5 = arith.constant 0 : index
    %c0_6 = arith.constant 0 : index
    %3 = vector.load %arg4[%c0_5, %c0_6] : memref<1x128xf32, #tpu.memory_space<vmem>>, vector<1x128xf32>
    %c0_7 = arith.constant 0 : index
    %c0_8 = arith.constant 0 : index
    %4 = vector.load %arg5[%c0_7, %c0_8] : memref<128x128xbf16, #tpu.memory_space<vmem>>, vector<128x128xbf16>
    %c0_9 = arith.constant 0 : index
    %c0_10 = arith.constant 0 : index
    %5 = vector.load %arg6[%c0_9, %c0_10] : memref<1x128xf32, #tpu.memory_space<vmem>>, vector<1x128xf32>
    %6 = arith.truncf %1 : vector<64x64xf32> to vector<64x64xbf16>
    %cst = arith.constant dense<0.000000e+00> : vector<64x128xf32>
    %7 = tpu.matmul %6, %2, %cst {dimension_numbers = #tpu.dot_dimension_numbers<[1], [0], [0], [1], [0, 0, 1, 1], [], []>} : vector<64x64xbf16>, vector<64x128xbf16>, vector<64x128xf32> -> vector<64x128xf32>
    %8 = vector.broadcast %3 : vector<1x128xf32> to vector<64x128xf32>
    %9 = arith.addf %7, %8 : vector<64x128xf32>
    %cst_11 = arith.constant 0.000000e+00 : f32
    %10 = vector.broadcast %cst_11 : f32 to vector<64x128xf32>
    %11 = arith.maximumf %9, %10 : vector<64x128xf32>
    %12 = arith.truncf %11 : vector<64x128xf32> to vector<64x128xbf16>
    %cst_12 = arith.constant dense<0.000000e+00> : vector<64x128xf32>
    %13 = tpu.matmul %12, %4, %cst_12 {dimension_numbers = #tpu.dot_dimension_numbers<[1], [0], [0], [1], [0, 0, 1, 1], [], []>} : vector<64x128xbf16>, vector<128x128xbf16>, vector<64x128xf32> -> vector<64x128xf32>
    %14 = vector.broadcast %5 : vector<1x128xf32> to vector<64x128xf32>
    %15 = arith.addf %13, %14 : vector<64x128xf32>
    %16 = arith.addf %0, %15 : vector<64x128xf32>
    %c0_13 = arith.constant 0 : index
    %c0_14 = arith.constant 0 : index
    %17 = vector.load %arg7[%c0_13, %c0_14] : memref<128x256xbf16, #tpu.memory_space<vmem>>, vector<128x256xbf16>
    %c0_15 = arith.constant 0 : index
    %c0_16 = arith.constant 0 : index
    %18 = vector.load %arg8[%c0_15, %c0_16] : memref<1x256xf32, #tpu.memory_space<vmem>>, vector<1x256xf32>
    %c0_17 = arith.constant 0 : index
    %c0_18 = arith.constant 0 : index
    %19 = vector.load %arg9[%c0_17, %c0_18] : memref<256x128xbf16, #tpu.memory_space<vmem>>, vector<256x128xbf16>
    %c0_19 = arith.constant 0 : index
    %c0_20 = arith.constant 0 : index
    %20 = vector.load %arg10[%c0_19, %c0_20] : memref<1x128xf32, #tpu.memory_space<vmem>>, vector<1x128xf32>
    %21 = arith.truncf %16 : vector<64x128xf32> to vector<64x128xbf16>
    %cst_21 = arith.constant dense<0.000000e+00> : vector<64x256xf32>
    %22 = tpu.matmul %21, %17, %cst_21 {dimension_numbers = #tpu.dot_dimension_numbers<[1], [0], [0], [1], [0, 0, 1, 1], [], []>} : vector<64x128xbf16>, vector<128x256xbf16>, vector<64x256xf32> -> vector<64x256xf32>
    %23 = vector.broadcast %18 : vector<1x256xf32> to vector<64x256xf32>
    %24 = arith.addf %22, %23 : vector<64x256xf32>
    %cst_22 = arith.constant 0.000000e+00 : f32
    %25 = vector.broadcast %cst_22 : f32 to vector<64x256xf32>
    %26 = arith.maximumf %24, %25 : vector<64x256xf32>
    %27 = arith.truncf %26 : vector<64x256xf32> to vector<64x256xbf16>
    %cst_23 = arith.constant dense<0.000000e+00> : vector<64x128xf32>
    %28 = tpu.matmul %27, %19, %cst_23 {dimension_numbers = #tpu.dot_dimension_numbers<[1], [0], [0], [1], [0, 0, 1, 1], [], []>} : vector<64x256xbf16>, vector<256x128xbf16>, vector<64x128xf32> -> vector<64x128xf32>
    %29 = vector.broadcast %20 : vector<1x128xf32> to vector<64x128xf32>
    %30 = arith.addf %28, %29 : vector<64x128xf32>
    %31 = vector.extract_strided_slice %30 {offsets = [0, 0], sizes = [64, 64], strides = [1, 1]} : vector<64x128xf32> to vector<64x64xf32>
    %32 = vector.extract_strided_slice %30 {offsets = [0, 64], sizes = [64, 64], strides = [1, 1]} : vector<64x128xf32> to vector<64x64xf32>
    %cst_24 = arith.constant 5.000000e-01 : f32
    %33 = vector.broadcast %cst_24 : f32 to vector<64x64xf32>
    %34 = arith.mulf %33, %31 : vector<64x64xf32>
    %35 = math.tanh %34 : vector<64x64xf32>
    %cst_25 = arith.constant 2.000000e+00 : f32
    %36 = vector.broadcast %cst_25 : f32 to vector<64x64xf32>
    %37 = arith.mulf %36, %35 : vector<64x64xf32>
    %38 = math.exp %37 : vector<64x64xf32>
    %39 = arith.mulf %38, %1 : vector<64x64xf32>
    %40 = arith.addf %39, %32 : vector<64x64xf32>
    %c0_26 = arith.constant 0 : index
    %c0_27 = arith.constant 0 : index
    %41 = vector.load %arg11[%c0_26, %c0_27] : memref<64x128xf32, #tpu.memory_space<vmem>>, vector<64x128xf32>
    tpu.vector_store %arg11[%c0_26, %c0_27], %16 {strides = array<i32>} : memref<64x128xf32, #tpu.memory_space<vmem>>, vector<64x128xf32>,
    %c0_28 = arith.constant 0 : index
    %c0_29 = arith.constant 0 : index
    %42 = vector.load %arg12[%c0_28, %c0_29] : memref<64x64xf32, #tpu.memory_space<vmem>>, vector<64x64xf32>
    tpu.vector_store %arg12[%c0_28, %c0_29], %40 {strides = array<i32>} : memref<64x64xf32, #tpu.memory_space<vmem>>, vector<64x64xf32>,
    return
  }
  func.func @transform_0(%arg0: i32) -> (i32, i32) {
    %c0_i32 = arith.constant 0 : i32
    %c0_i32_0 = arith.constant 0 : i32
    return %arg0, %c0_i32 : i32, i32
  }
  func.func @transform_1(%arg0: i32) -> (i32, i32) {
    %c0_i32 = arith.constant 0 : i32
    %c0_i32_0 = arith.constant 0 : i32
    return %arg0, %c0_i32 : i32, i32
  }
  func.func @transform_2(%arg0: i32) -> (i32, i32) {
    %c0_i32 = arith.constant 0 : i32
    %c0_i32_0 = arith.constant 0 : i32
    %c0_i32_1 = arith.constant 0 : i32
    return %c0_i32, %c0_i32_0 : i32, i32
  }
  func.func @transform_3(%arg0: i32) -> (i32, i32) {
    %c0_i32 = arith.constant 0 : i32
    %c0_i32_0 = arith.constant 0 : i32
    %c0_i32_1 = arith.constant 0 : i32
    return %c0_i32, %c0_i32_0 : i32, i32
  }
  func.func @transform_4(%arg0: i32) -> (i32, i32) {
    %c0_i32 = arith.constant 0 : i32
    %c0_i32_0 = arith.constant 0 : i32
    %c0_i32_1 = arith.constant 0 : i32
    return %c0_i32, %c0_i32_0 : i32, i32
  }
  func.func @transform_5(%arg0: i32) -> (i32, i32) {
    %c0_i32 = arith.constant 0 : i32
    %c0_i32_0 = arith.constant 0 : i32
    %c0_i32_1 = arith.constant 0 : i32
    return %c0_i32, %c0_i32_0 : i32, i32
  }
  func.func @transform_6(%arg0: i32) -> (i32, i32) {
    %c0_i32 = arith.constant 0 : i32
    %c0_i32_0 = arith.constant 0 : i32
    %c0_i32_1 = arith.constant 0 : i32
    return %c0_i32, %c0_i32_0 : i32, i32
  }
  func.func @transform_7(%arg0: i32) -> (i32, i32) {
    %c0_i32 = arith.constant 0 : i32
    %c0_i32_0 = arith.constant 0 : i32
    %c0_i32_1 = arith.constant 0 : i32
    return %c0_i32, %c0_i32_0 : i32, i32
  }
  func.func @transform_8(%arg0: i32) -> (i32, i32) {
    %c0_i32 = arith.constant 0 : i32
    %c0_i32_0 = arith.constant 0 : i32
    %c0_i32_1 = arith.constant 0 : i32
    return %c0_i32, %c0_i32_0 : i32, i32
  }
  func.func @transform_9(%arg0: i32) -> (i32, i32) {
    %c0_i32 = arith.constant 0 : i32
    %c0_i32_0 = arith.constant 0 : i32
    %c0_i32_1 = arith.constant 0 : i32
    return %c0_i32, %c0_i32_0 : i32, i32
  }
  func.func @transform_10(%arg0: i32) -> (i32, i32) {
    %c0_i32 = arith.constant 0 : i32
    %c0_i32_0 = arith.constant 0 : i32
    return %arg0, %c0_i32 : i32, i32
  }
  func.func @transform_11(%arg0: i32) -> (i32, i32) {
    %c0_i32 = arith.constant 0 : i32
    %c0_i32_0 = arith.constant 0 : i32
    return %arg0, %c0_i32 : i32, i32
  }
}

</mosaic_0001>

<llo_original>
// kernel: _lambda_.1
$region0: #{_lambda_.1}
  #allocation0 [shape = 'u32[]', space=smem, size = 0x4, offset = 0x4, fixed_abs, tag = 'smem constant byte address 0x4 - core index']
  #allocation1 [shape = 'u32[72,128]{1,0:T(1,128)}', space=vmem, size = 0x9000, scoped, tag = 'internal scratch']
  %s0 = inlined_call_operand.vmem [shape: f32[128,128], index: 0, kind: input, shape index: {}]
  %s1 = inlined_call_operand.vmem [shape: f32[128,64], index: 1, kind: input, shape index: {}]
  %s2 = inlined_call_operand.vmem [shape: bf16[64,128], index: 2, kind: input, shape index: {}]
  %s3 = inlined_call_operand.vmem [shape: f32[1,128], index: 3, kind: input, shape index: {}]
  %s4 = inlined_call_operand.vmem [shape: bf16[128,128], index: 4, kind: input, shape index: {}]
  %s5 = inlined_call_operand.vmem [shape: f32[1,128], index: 5, kind: input, shape index: {}]
  %s6 = inlined_call_operand.vmem [shape: bf16[128,256], index: 6, kind: input, shape index: {}]
  %s7 = inlined_call_operand.vmem [shape: f32[1,256], index: 7, kind: input, shape index: {}]
  %s8 = inlined_call_operand.vmem [shape: bf16[256,128], index: 8, kind: input, shape index: {}]
  %s9 = inlined_call_operand.vmem [shape: f32[1,128], index: 9, kind: input, shape index: {}]
  %s10 = inlined_call_operand.hbm [shape: f32[128,128], index: 10, kind: output, shape index: {0}]
  %s11 = inlined_call_operand.hbm [shape: f32[128,64], index: 11, kind: output, shape index: {1}]
  %12 = xla_tuple %s10, %s11
  %s13 = sld [smem:[#allocation0]]
  $region81: #{_lambda_.1} parent=0
    _
  %s15 = ssub.s32 1, %s13
  %s16 = scalar_select 0, %s15, %s13
  $region1: #{_lambda_.1} parent=0
    #allocation2 [shape = 'u8[65536]{0}', space=vmem, size = 0x10000, scoped, tag = 'output window, operand 0']
    #allocation3 [shape = 's32[2]{0}', space=sflag, size = 0x8, scoped, tag = 'scoped memory for _lambda_.1']
    #allocation4 [shape = 'u8[65536]{0}', space=vmem, size = 0x10000, scoped, tag = 'output window, operand 1']
    #allocation5 [shape = 's32[2]{0}', space=sflag, size = 0x8, scoped, tag = 'scoped memory for _lambda_.1']
    %17 = vsyncpa [#allocation3], 0
    %s18 = scalar_lea.sflag [#allocation3], 1
    %19 = vsyncpa %s18, 0
    %20 = vsyncpa [#allocation5], 0
    %s21 = scalar_lea.sflag [#allocation5], 1
    %22 = vsyncpa %s21, 0
    loop: start=0, step=1, limit=4
    $region2: #{_lambda_.1} parent=1 // loop_pre_header
      _
    $region3: #{_lambda_.1} parent=1 // loop_header
      %s24 = sphi 0, %s28
      %p25 = scmp.ge.s32.totalorder %s24, 4
      %s34 = sphi 0, %s36
      %s37 = sphi 0, %s34
      %s38 = sphi 0, %s37
      %s54 = sphi 0, %s38
      %s60 = sphi 0, %s62
      %s63 = sphi 0, %s60
      %s64 = sphi 0, %s63
      %s80 = sphi 0, %s64
      %s84 = sphi 0, %s84
      %s86 = sphi 0, %s84
      %s87 = sphi 0, %s86
      %s101 = sphi 0, %s87
      %s105 = sphi 0, %s105
      %s107 = sphi 0, %s105
      %s108 = sphi 0, %s107
      %s122 = sphi 0, %s108
      %s126 = sphi 0, %s126
      %s128 = sphi 0, %s126
      %s129 = sphi 0, %s128
      %s143 = sphi 0, %s129
      %s147 = sphi 0, %s147
      %s149 = sphi 0, %s147
      %s150 = sphi 0, %s149
      %s164 = sphi 0, %s150
      %s168 = sphi 0, %s168
      %s170 = sphi 0, %s168
      %s171 = sphi 0, %s170
      %s185 = sphi 0, %s171
      %s189 = sphi 0, %s189
      %s191 = sphi 0, %s189
      %s192 = sphi 0, %s191
      %s206 = sphi 0, %s192
      %s210 = sphi 0, %s210
      %s212 = sphi 0, %s210
      %s213 = sphi 0, %s212
      %s227 = sphi 0, %s213
      %s231 = sphi 0, %s231
      %s233 = sphi 0, %s231
      %s234 = sphi 0, %s233
      %s248 = sphi 0, %s234
      %s254 = sphi 0, %s256
      %s257 = sphi 0, %s254
      %s258 = sphi 0, %s257
      %s274 = sphi 0, %s258
      %s280 = sphi 0, %s282
      %s283 = sphi 0, %s280
      %s284 = sphi 0, %s283
      %s300 = sphi 0, %s284
    $region4: #{_lambda_.1} parent=1 // loop_header_branch
      %27 = sbr.rel (%p25) target = $region8
    $region5: #{_lambda_.1} parent=1 // loop_body
      %s29 = ssub.s32 %s24, 1
      %s30 = ssub.s32 %s24, 2
      %s31 = sadd.s32 %s24, 1
      %s32 = ssub.s32 %s24, %s31
      %p33 = scmp.eq.s32.totalorder %s32, 0
      %s35 = sadd.s32 %s34, 1
      %s36 = scalar_select %p33, %s34, %s35
      %p39 = pneg %p33
      %p40 = scmp.eq.s32.totalorder %s24, 1
      %p41 = por %p39, %p40
      %p42 = scmp.ne.s32.totalorder %s34, %s37
      %p43 = scmp.eq.s32.totalorder %s24, 0
      %p44 = por %p42, %p43
      %p45 = scmp.ne.s32.totalorder %s34, %s37
      %p46 = scmp.eq.s32.totalorder %s29, 1
      %p47 = por %p45, %p46
      %p48 = scmp.ne.s32.totalorder %s37, %s38
      %p49 = scmp.eq.s32.totalorder %s29, 0
      %p50 = por %p48, %p49
      %p51 = scmp.ne.s32.totalorder %s37, %s38
      %p52 = scmp.eq.s32.totalorder %s30, 1
      %p53 = por %p51, %p52
      %p55 = scmp.ne.s32.totalorder %s38, %s54
      %p56 = scmp.eq.s32.totalorder %s30, 0
      %p57 = por %p55, %p56
      %s58 = ssub.s32 %s24, %s31
      %p59 = scmp.eq.s32.totalorder %s58, 0
      %s61 = sadd.s32 %s60, 1
      %s62 = scalar_select %p59, %s60, %s61
      %p65 = pneg %p59
      %p66 = scmp.eq.s32.totalorder %s24, 1
      %p67 = por %p65, %p66
      %p68 = scmp.ne.s32.totalorder %s60, %s63
      %p69 = scmp.eq.s32.totalorder %s24, 0
      %p70 = por %p68, %p69
      %p71 = scmp.ne.s32.totalorder %s60, %s63
      %p72 = scmp.eq.s32.totalorder %s29, 1
      %p73 = por %p71, %p72
      %p74 = scmp.ne.s32.totalorder %s63, %s64
      %p75 = scmp.eq.s32.totalorder %s29, 0
      %p76 = por %p74, %p75
      %p77 = scmp.ne.s32.totalorder %s63, %s64
      %p78 = scmp.eq.s32.totalorder %s30, 1
      %p79 = por %p77, %p78
      %p81 = scmp.ne.s32.totalorder %s64, %s80
      %p82 = scmp.eq.s32.totalorder %s30, 0
      %p83 = por %p81, %p82
      %s85 = sadd.s32 %s84, 1
      %p88 = scmp.eq.s32.totalorder %s24, 1
      %p89 = scmp.ne.s32.totalorder %s84, %s86
      %p90 = scmp.eq.s32.totalorder %s24, 0
      %p91 = por %p89, %p90
      %p92 = scmp.ne.s32.totalorder %s84, %s86
      %p93 = scmp.eq.s32.totalorder %s29, 1
      %p94 = por %p92, %p93
      %p95 = scmp.ne.s32.totalorder %s86, %s87
      %p96 = scmp.eq.s32.totalorder %s29, 0
      %p97 = por %p95, %p96
      %p98 = scmp.ne.s32.totalorder %s86, %s87
      %p99 = scmp.eq.s32.totalorder %s30, 1
      %p100 = por %p98, %p99
      %p102 = scmp.ne.s32.totalorder %s87, %s101
      %p103 = scmp.eq.s32.totalorder %s30, 0
      %p104 = por %p102, %p103
      %s106 = sadd.s32 %s105, 1
      %p109 = scmp.eq.s32.totalorder %s24, 1
      %p110 = scmp.ne.s32.totalorder %s105, %s107
      %p111 = scmp.eq.s32.totalorder %s24, 0
      %p112 = por %p110, %p111
      %p113 = scmp.ne.s32.totalorder %s105, %s107
      %p114 = scmp.eq.s32.totalorder %s29, 1
      %p115 = por %p113, %p114
      %p116 = scmp.ne.s32.totalorder %s107, %s108
      %p117 = scmp.eq.s32.totalorder %s29, 0
      %p118 = por %p116, %p117
      %p119 = scmp.ne.s32.totalorder %s107, %s108
      %p120 = scmp.eq.s32.totalorder %s30, 1
      %p121 = por %p119, %p120
      %p123 = scmp.ne.s32.totalorder %s108, %s122
      %p124 = scmp.eq.s32.totalorder %s30, 0
      %p125 = por %p123, %p124
      %s127 = sadd.s32 %s126, 1
      %p130 = scmp.eq.s32.totalorder %s24, 1
      %p131 = scmp.ne.s32.totalorder %s126, %s128
      %p132 = scmp.eq.s32.totalorder %s24, 0
      %p133 = por %p131, %p132
      %p134 = scmp.ne.s32.totalorder %s126, %s128
      %p135 = scmp.eq.s32.totalorder %s29, 1
      %p136 = por %p134, %p135
      %p137 = scmp.ne.s32.totalorder %s128, %s129
      %p138 = scmp.eq.s32.totalorder %s29, 0
      %p139 = por %p137, %p138
      %p140 = scmp.ne.s32.totalorder %s128, %s129
      %p141 = scmp.eq.s32.totalorder %s30, 1
      %p142 = por %p140, %p141
      %p144 = scmp.ne.s32.totalorder %s129, %s143
      %p145 = scmp.eq.s32.totalorder %s30, 0
      %p146 = por %p144, %p145
      %s148 = sadd.s32 %s147, 1
      %p151 = scmp.eq.s32.totalorder %s24, 1
      %p152 = scmp.ne.s32.totalorder %s147, %s149
      %p153 = scmp.eq.s32.totalorder %s24, 0
      %p154 = por %p152, %p153
      %p155 = scmp.ne.s32.totalorder %s147, %s149
      %p156 = scmp.eq.s32.totalorder %s29, 1
      %p157 = por %p155, %p156
      %p158 = scmp.ne.s32.totalorder %s149, %s150
      %p159 = scmp.eq.s32.totalorder %s29, 0
      %p160 = por %p158, %p159
      %p161 = scmp.ne.s32.totalorder %s149, %s150
      %p162 = scmp.eq.s32.totalorder %s30, 1
      %p163 = por %p161, %p162
      %p165 = scmp.ne.s32.totalorder %s150, %s164
      %p166 = scmp.eq.s32.totalorder %s30, 0
      %p167 = por %p165, %p166
      %s169 = sadd.s32 %s168, 1
      %p172 = scmp.eq.s32.totalorder %s24, 1
      %p173 = scmp.ne.s32.totalorder %s168, %s170
      %p174 = scmp.eq.s32.totalorder %s24, 0
      %p175 = por %p173, %p174
      %p176 = scmp.ne.s32.totalorder %s168, %s170
      %p177 = scmp.eq.s32.totalorder %s29, 1
      %p178 = por %p176, %p177
      %p179 = scmp.ne.s32.totalorder %s170, %s171
      %p180 = scmp.eq.s32.totalorder %s29, 0
      %p181 = por %p179, %p180
      %p182 = scmp.ne.s32.totalorder %s170, %s171
      %p183 = scmp.eq.s32.totalorder %s30, 1
      %p184 = por %p182, %p183
      %p186 = scmp.ne.s32.totalorder %s171, %s185
      %p187 = scmp.eq.s32.totalorder %s30, 0
      %p188 = por %p186, %p187
      %s190 = sadd.s32 %s189, 1
      %p193 = scmp.eq.s32.totalorder %s24, 1
      %p194 = scmp.ne.s32.totalorder %s189, %s191
      %p195 = scmp.eq.s32.totalorder %s24, 0
      %p196 = por %p194, %p195
      %p197 = scmp.ne.s32.totalorder %s189, %s191
      %p198 = scmp.eq.s32.totalorder %s29, 1
      %p199 = por %p197, %p198
      %p200 = scmp.ne.s32.totalorder %s191, %s192
      %p201 = scmp.eq.s32.totalorder %s29, 0
      %p202 = por %p200, %p201
      %p203 = scmp.ne.s32.totalorder %s191, %s192
      %p204 = scmp.eq.s32.totalorder %s30, 1
      %p205 = por %p203, %p204
      %p207 = scmp.ne.s32.totalorder %s192, %s206
      %p208 = scmp.eq.s32.totalorder %s30, 0
      %p209 = por %p207, %p208
      %s211 = sadd.s32 %s210, 1
      %p214 = scmp.eq.s32.totalorder %s24, 1
      %p215 = scmp.ne.s32.totalorder %s210, %s212
      %p216 = scmp.eq.s32.totalorder %s24, 0
      %p217 = por %p215, %p216
      %p218 = scmp.ne.s32.totalorder %s210, %s212
      %p219 = scmp.eq.s32.totalorder %s29, 1
      %p220 = por %p218, %p219
      %p221 = scmp.ne.s32.totalorder %s212, %s213
      %p222 = scmp.eq.s32.totalorder %s29, 0
      %p223 = por %p221, %p222
      %p224 = scmp.ne.s32.totalorder %s212, %s213
      %p225 = scmp.eq.s32.totalorder %s30, 1
      %p226 = por %p224, %p225
      %p228 = scmp.ne.s32.totalorder %s213, %s227
      %p229 = scmp.eq.s32.totalorder %s30, 0
      %p230 = por %p228, %p229
      %s232 = sadd.s32 %s231, 1
      %p235 = scmp.eq.s32.totalorder %s24, 1
      %p236 = scmp.ne.s32.totalorder %s231, %s233
      %p237 = scmp.eq.s32.totalorder %s24, 0
      %p238 = por %p236, %p237
      %p239 = scmp.ne.s32.totalorder %s231, %s233
      %p240 = scmp.eq.s32.totalorder %s29, 1
      %p241 = por %p239, %p240
      %p242 = scmp.ne.s32.totalorder %s233, %s234
      %p243 = scmp.eq.s32.totalorder %s29, 0
      %p244 = por %p242, %p243
      %p245 = scmp.ne.s32.totalorder %s233, %s234
      %p246 = scmp.eq.s32.totalorder %s30, 1
      %p247 = por %p245, %p246
      %p249 = scmp.ne.s32.totalorder %s234, %s248
      %p250 = scmp.eq.s32.totalorder %s30, 0
      %p251 = por %p249, %p250
      %s252 = ssub.s32 %s24, %s31
      %p253 = scmp.eq.s32.totalorder %s252, 0
      %s255 = sadd.s32 %s254, 1
      %s256 = scalar_select %p253, %s254, %s255
      %p259 = pneg %p253
      %p260 = scmp.eq.s32.totalorder %s24, 1
      %p261 = por %p259, %p260
      %p262 = scmp.ne.s32.totalorder %s254, %s257
      %p263 = scmp.eq.s32.totalorder %s24, 0
      %p264 = por %p262, %p263
      %p265 = scmp.ne.s32.totalorder %s254, %s257
      %p266 = scmp.eq.s32.totalorder %s29, 1
      %p267 = por %p265, %p266
      %p268 = scmp.ne.s32.totalorder %s257, %s258
      %p269 = scmp.eq.s32.totalorder %s29, 0
      %p270 = por %p268, %p269
      %p271 = scmp.ne.s32.totalorder %s257, %s258
      %p272 = scmp.eq.s32.totalorder %s30, 1
      %p273 = por %p271, %p272
      %p275 = scmp.ne.s32.totalorder %s258, %s274
      %p276 = scmp.eq.s32.totalorder %s30, 0
      %p277 = por %p275, %p276
      %s278 = ssub.s32 %s24, %s31
      %p279 = scmp.eq.s32.totalorder %s278, 0
      %s281 = sadd.s32 %s280, 1
      %s282 = scalar_select %p279, %s280, %s281
      %p285 = pneg %p279
      %p286 = scmp.eq.s32.totalorder %s24, 1
      %p287 = por %p285, %p286
      %p288 = scmp.ne.s32.totalorder %s280, %s283
      %p289 = scmp.eq.s32.totalorder %s24, 0
      %p290 = por %p288, %p289
      %p291 = scmp.ne.s32.totalorder %s280, %s283
      %p292 = scmp.eq.s32.totalorder %s29, 1
      %p293 = por %p291, %p292
      %p294 = scmp.ne.s32.totalorder %s283, %s284
      %p295 = scmp.eq.s32.totalorder %s29, 0
      %p296 = por %p294, %p295
      %p297 = scmp.ne.s32.totalorder %s283, %s284
      %p298 = scmp.eq.s32.totalorder %s30, 1
      %p299 = por %p297, %p298
      %p301 = scmp.ne.s32.totalorder %s284, %s300
      %p302 = scmp.eq.s32.totalorder %s30, 0
      %p303 = por %p301, %p302
      %p304 = scmp.le.s32.totalorder 1, %s24
      %p305 = scmp.lt.s32.totalorder %s24, 3
      %p306 = pnand %p304, %p305
      %p307 = pneg %p306
      // Predicated region
      $region9: #{_lambda_.1} parent=5 // pred_check
        _
      $region10: #{_lambda_.1} parent=5 // pred_check_branch
        %309 = sbr.rel (%p306) target = $region12
      $region11: #{_lambda_.1} parent=5 // pred_region
        %s310 = ssub.s32 %s24, 1
        // Predicated region
        $region13: #{_lambda_.1} parent=11 // pred_check
          %p311 = pneg %p97
        $region14: #{_lambda_.1} parent=11 // pred_check_branch
          %313 = sbr.rel (%p311) target = $region16
        $region15: #{_lambda_.1} parent=11 // pred_region
          _
        $region16: #{_lambda_.1} parent=11 // pred_fallthru
          _
        // Predicated region
        $region17: #{_lambda_.1} parent=11 // pred_check
          %p314 = pneg %p118
        $region18: #{_lambda_.1} parent=11 // pred_check_branch
          %316 = sbr.rel (%p314) target = $region20
        $region19: #{_lambda_.1} parent=11 // pred_region
          _
        $region20: #{_lambda_.1} parent=11 // pred_fallthru
          _
        // Predicated region
        $region21: #{_lambda_.1} parent=11 // pred_check
          %p317 = pneg %p139
        $region22: #{_lambda_.1} parent=11 // pred_check_branch
          %319 = sbr.rel (%p317) target = $region24
        $region23: #{_lambda_.1} parent=11 // pred_region
          _
        $region24: #{_lambda_.1} parent=11 // pred_fallthru
          _
        // Predicated region
        $region25: #{_lambda_.1} parent=11 // pred_check
          %p320 = pneg %p160
        $region26: #{_lambda_.1} parent=11 // pred_check_branch
          %322 = sbr.rel (%p320) target = $region28
        $region27: #{_lambda_.1} parent=11 // pred_region
          _
        $region28: #{_lambda_.1} parent=11 // pred_fallthru
          _
        // Predicated region
        $region29: #{_lambda_.1} parent=11 // pred_check
          %p323 = pneg %p181
        $region30: #{_lambda_.1} parent=11 // pred_check_branch
          %325 = sbr.rel (%p323) target = $region32
        $region31: #{_lambda_.1} parent=11 // pred_region
          _
        $region32: #{_lambda_.1} parent=11 // pred_fallthru
          _
        // Predicated region
        $region33: #{_lambda_.1} parent=11 // pred_check
          %p326 = pneg %p202
        $region34: #{_lambda_.1} parent=11 // pred_check_branch
          %328 = sbr.rel (%p326) target = $region36
        $region35: #{_lambda_.1} parent=11 // pred_region
          _
        $region36: #{_lambda_.1} parent=11 // pred_fallthru
          _
        // Predicated region
        $region37: #{_lambda_.1} parent=11 // pred_check
          %p329 = pneg %p223
        $region38: #{_lambda_.1} parent=11 // pred_check_branch
          %331 = sbr.rel (%p329) target = $region40
        $region39: #{_lambda_.1} parent=11 // pred_region
          _
        $region40: #{_lambda_.1} parent=11 // pred_fallthru
          _
        // Predicated region
        $region41: #{_lambda_.1} parent=11 // pred_check
          %p332 = pneg %p244
        $region42: #{_lambda_.1} parent=11 // pred_check_branch
          %334 = sbr.rel (%p332) target = $region44
        $region43: #{_lambda_.1} parent=11 // pred_region
          _
        $region44: #{_lambda_.1} parent=11 // pred_fallthru
          _
      $region12: #{_lambda_.1} parent=5 // pred_fallthru
        _
      %p335 = scmp.lt.s32.totalorder %s24, 2
      // Predicated region
      $region45: #{_lambda_.1} parent=5 // pred_check
        %p336 = pneg %p335
      $region46: #{_lambda_.1} parent=5 // pred_check_branch
        %338 = sbr.rel (%p336) target = $region48
      $region47: #{_lambda_.1} parent=5 // pred_region
        // Predicated region
        $region49: #{_lambda_.1} parent=47 // pred_check
          %p339 = pneg %p44
        $region50: #{_lambda_.1} parent=47 // pred_check_branch
          %341 = sbr.rel (%p339) target = $region52
        $region51: #{_lambda_.1} parent=47 // pred_region
          %s342 = smul.u32 8, %s24
          %p343 = scmp.lt.s32.totalorder %s342, 15
          %s344 = scalar_select %p343, %s342, 15
          %s345 = smul.addr %s344, 8
          %s346 = scalar_lea.vmem %s0, %s345
          %s347 = smul.u32 8, %s24
        $region52: #{_lambda_.1} parent=47 // pred_fallthru
          _
        // Predicated region
        $region53: #{_lambda_.1} parent=47 // pred_check
          %p348 = pneg %p70
        $region54: #{_lambda_.1} parent=47 // pred_check_branch
          %350 = sbr.rel (%p348) target = $region56
        $region55: #{_lambda_.1} parent=47 // pred_region
          %s351 = smul.u32 8, %s24
          %p352 = scmp.lt.s32.totalorder %s351, 15
          %s353 = scalar_select %p352, %s351, 15
          %s354 = smul.addr %s353, 8
          %s355 = scalar_lea.vmem %s1, %s354
          %s356 = smul.u32 8, %s24
        $region56: #{_lambda_.1} parent=47 // pred_fallthru
          _
      $region48: #{_lambda_.1} parent=5 // pred_fallthru
        _
      %p357 = scmp.le.s32.totalorder 1, %s24
      %p358 = scmp.lt.s32.totalorder %s24, 3
      %p359 = pnand %p357, %p358
      %p360 = pneg %p359
      // Predicated region
      $region57: #{_lambda_.1} parent=5 // pred_check
        _
      $region58: #{_lambda_.1} parent=5 // pred_check_branch
        %362 = sbr.rel (%p359) target = $region60
      $region59: #{_lambda_.1} parent=5 // pred_region
        %s363 = ssub.s32 %s24, 1
        %s364 = smul.u32 8, %s29
        %p365 = scmp.lt.s32.totalorder %s364, 15
        %s366 = scalar_select %p365, %s364, 15
        %s367 = smul.addr %s366, 8
        %s368 = scalar_lea.vmem %s0, %s367
        %p369 = pneg %p50
        %p370 = pneg %p47
        %s371 = smul.u32 8, %s29
        %p372 = scmp.lt.s32.totalorder %s371, 15
        %s373 = scalar_select %p372, %s371, 15
        %s374 = smul.addr %s373, 8
        %s375 = scalar_lea.vmem %s1, %s374
        %p376 = pneg %p76
        %p377 = pneg %p73
        %p378 = pneg %p97
        %p379 = pneg %p94
        %p380 = pneg %p118
        %p381 = pneg %p115
        %p382 = pneg %p139
        %p383 = pneg %p136
        %p384 = pneg %p160
        %p385 = pneg %p157
        %p386 = pneg %p181
        %p387 = pneg %p178
        %p388 = pneg %p202
        %p389 = pneg %p199
        %p390 = pneg %p223
        %p391 = pneg %p220
        %p392 = pneg %p244
        %p393 = pneg %p241
        %p394 = pneg %p270
        %p395 = pneg %p267
        %s396 = sand.u32 %s257, 1
        %s397 = scalar_lea.sflag [#allocation3], %s396
        %s398 = sand.u32 %s257, 1
        %s399 = smul.addr %s398, 64
        %s400 = scalar_lea.vmem [#allocation2], %s399
        %p401 = pneg %p296
        %p402 = pneg %p293
        %s403 = sand.u32 %s283, 1
        %s404 = scalar_lea.sflag [#allocation5], %s403
        %s405 = sand.u32 %s283, 1
        %s406 = smul.addr %s405, 64
        %s407 = scalar_lea.vmem [#allocation4], %s406
        %s408 = smul.u32 8, %s29
        %p409 = scmp.lt.s32.totalorder %s408, 15
        %s410 = scalar_select %p409, %s408, 15
        %s411 = smul.addr %s410, 8
        %s412 = scalar_lea.vmem %s0, %s411
        %s413 = smul.u32 8, %s29
        %s414 = smul.u32 8, %s29
        %p415 = scmp.lt.s32.totalorder %s414, 15
        %s416 = scalar_select %p415, %s414, 15
        %s417 = smul.addr %s416, 8
        %s418 = scalar_lea.vmem %s1, %s417
        %s419 = smul.u32 8, %s29
        %s420 = smul.u32 8, %s29
        %s421 = smul.u32 8, %s29
        %v423 = vld [vmem:[%s412] sm:$0xff]
        %v424 = vld [vmem:[%s412 + $0x8] sm:$0xff]
        %v425 = vld [vmem:[%s412 + $0x10] sm:$0xff]
        %v426 = vld [vmem:[%s412 + $0x18] sm:$0xff]
        %v427 = vld [vmem:[%s412 + $0x20] sm:$0xff]
        %v428 = vld [vmem:[%s412 + $0x28] sm:$0xff]
        %v429 = vld [vmem:[%s412 + $0x30] sm:$0xff]
        %v430 = vld [vmem:[%s412 + $0x38] sm:$0xff]
        %v431 = vld [vmem:[%s418] sm:$0xff]
        %v432 = vld [vmem:[%s418 + $0x8] sm:$0xff]
        %v433 = vld [vmem:[%s418 + $0x10] sm:$0xff]
        %v434 = vld [vmem:[%s418 + $0x18] sm:$0xff]
        %v435 = vld [vmem:[%s418 + $0x20] sm:$0xff]
        %v436 = vld [vmem:[%s418 + $0x28] sm:$0xff]
        %v437 = vld [vmem:[%s418 + $0x30] sm:$0xff]
        %v438 = vld [vmem:[%s418 + $0x38] sm:$0xff]
        %v439 = vld [vmem:[%s2] sm:$0xf]
        %v440 = vld [vmem:[%s2 + $0x4] sm:$0xf]
        %v441 = vld [vmem:[%s2 + $0x8] sm:$0xf]
        %v442 = vld [vmem:[%s2 + $0xc] sm:$0xf]
        %v443 = vld [vmem:[%s2 + $0x10] sm:$0xf]
        %v444 = vld [vmem:[%s2 + $0x14] sm:$0xf]
        %v445 = vld [vmem:[%s2 + $0x18] sm:$0xf]
        %v446 = vld [vmem:[%s2 + $0x1c] sm:$0xf]
        %v447 = vld [vmem:[%s3] sm:$0x1]
        %v448 = vld [vmem:[%s4] sm:$0xf]
        %v449 = vld [vmem:[%s4 + $0x4] sm:$0xf]
        %v450 = vld [vmem:[%s4 + $0x8] sm:$0xf]
        %v451 = vld [vmem:[%s4 + $0xc] sm:$0xf]
        %v452 = vld [vmem:[%s4 + $0x10] sm:$0xf]
        %v453 = vld [vmem:[%s4 + $0x14] sm:$0xf]
        %v454 = vld [vmem:[%s4 + $0x18] sm:$0xf]
        %v455 = vld [vmem:[%s4 + $0x1c] sm:$0xf]
        %v456 = vld [vmem:[%s4 + $0x20] sm:$0xf]
        %v457 = vld [vmem:[%s4 + $0x24] sm:$0xf]
        %v458 = vld [vmem:[%s4 + $0x28] sm:$0xf]
        %v459 = vld [vmem:[%s4 + $0x2c] sm:$0xf]
        %v460 = vld [vmem:[%s4 + $0x30] sm:$0xf]
        %v461 = vld [vmem:[%s4 + $0x34] sm:$0xf]
        %v462 = vld [vmem:[%s4 + $0x38] sm:$0xf]
        %v463 = vld [vmem:[%s4 + $0x3c] sm:$0xf]
        %v464 = vld [vmem:[%s5] sm:$0x1]
        %v465 = vpack.c.bf16 %v432, %v431
        %v466 = vpack.c.bf16 %v434, %v433
        %v467 = vpack.c.bf16 %v436, %v435
        %v468 = vpack.c.bf16 %v438, %v437
        %v470 = vperm.slane %v447, 0
        %v480 = vunpack.c.l.b16 %v439
        %v481 = vunpack.c.l.b16 %v440
        %v482 = vunpack.c.l.b16 %v441
        %v483 = vunpack.c.l.b16 %v442
        %v484 = vunpack.c.l.b16 %v443
        %v485 = vunpack.c.l.b16 %v444
        %v486 = vunpack.c.l.b16 %v445
        %v487 = vunpack.c.l.b16 %v446
        %v488 = vpack.c.b16 %v481, %v480
        %v489 = vpack.c.b16 %v483, %v482
        %v490 = vpack.c.b16 %v485, %v484
        %v491 = vpack.c.b16 %v487, %v486
        %vm496 = vcmask 523264
        %v498 = vsel %vm496, %v465, 0
        %v501 = vsel %vm496, %v466, 0
        %v504 = vsel %vm496, %v467, 0
        %v507 = vsel %vm496, %v468, 0
        %509 = vmatpush.bf16.msra.mxu0 0
        %510 = vmatpush.bf16.msra.mxu0 0
        %511 = vmatpush.bf16.msra.mxu0 0
        %512 = vmatpush.bf16.msra.mxu0 0
        %513 = vmatpush.bf16.msra.mxu0 %v491
        %514 = vmatpush.bf16.msra.mxu0 %v490
        %515 = vmatpush.bf16.msra.mxu0 %v489
        %516 = vmatpush.bf16.msra.mxu0 %v488
        %517 = vmatmul.bf16.gmra.mxu0 %v498
        %v518 = vpop.f32.mrf.mxu0
        %v519 = vadd.f32 %v470, %v518
        %v520 = vpop.f32.mrf.mxu0
        %v521 = vadd.f32 %v470, %v520
        %522 = vmatmul.bf16.gmra.mxu0 %v501
        %v523 = vpop.f32.mrf.mxu0
        %v524 = vadd.f32 %v470, %v523
        %v525 = vpop.f32.mrf.mxu0
        %v526 = vadd.f32 %v470, %v525
        %527 = vmatmul.bf16.gmra.mxu0 %v504
        %v528 = vpop.f32.mrf.mxu0
        %v529 = vadd.f32 %v470, %v528
        %v530 = vpop.f32.mrf.mxu0
        %v531 = vadd.f32 %v470, %v530
        %532 = vmatmul.bf16.gmra.mxu0 %v507
        %v533 = vpop.f32.mrf.mxu0
        %v534 = vadd.f32 %v470, %v533
        %v535 = vpop.f32.mrf.mxu0
        %v536 = vadd.f32 %v470, %v535
        %537 = vdwg.mxu0
        %v538 = vmax.f32 %v519, 0.0
        %v539 = vmax.f32 %v521, 0.0
        %v540 = vmax.f32 %v524, 0.0
        %v541 = vmax.f32 %v526, 0.0
        %v542 = vmax.f32 %v529, 0.0
        %v543 = vmax.f32 %v531, 0.0
        %v544 = vmax.f32 %v534, 0.0
        %v545 = vmax.f32 %v536, 0.0
        %v546 = vpack.c.bf16 %v539, %v538
        %v547 = vpack.c.bf16 %v541, %v540
        %v548 = vpack.c.bf16 %v543, %v542
        %v549 = vpack.c.bf16 %v545, %v544
        %v551 = vperm.slane %v464, 0
        %v569 = vunpack.c.l.b16 %v448
        %v570 = vunpack.c.l.b16 %v449
        %v571 = vunpack.c.l.b16 %v450
        %v572 = vunpack.c.l.b16 %v451
        %v573 = vunpack.c.l.b16 %v452
        %v574 = vunpack.c.l.b16 %v453
        %v575 = vunpack.c.l.b16 %v454
        %v576 = vunpack.c.l.b16 %v455
        %v577 = vunpack.c.l.b16 %v456
        %v578 = vunpack.c.l.b16 %v457
        %v579 = vunpack.c.l.b16 %v458
        %v580 = vunpack.c.l.b16 %v459
        %v581 = vunpack.c.l.b16 %v460
        %v582 = vunpack.c.l.b16 %v461
        %v583 = vunpack.c.l.b16 %v462
        %v584 = vunpack.c.l.b16 %v463
        %v585 = vpack.c.b16 %v570, %v569
        %v586 = vpack.c.b16 %v572, %v571
        %v587 = vpack.c.b16 %v574, %v573
        %v588 = vpack.c.b16 %v576, %v575
        %v589 = vpack.c.b16 %v578, %v577
        %v590 = vpack.c.b16 %v580, %v579
        %v591 = vpack.c.b16 %v582, %v581
        %v592 = vpack.c.b16 %v584, %v583
        %601 = vmatpush.bf16.msra.mxu0 %v592
        %602 = vmatpush.bf16.msra.mxu0 %v591
        %603 = vmatpush.bf16.msra.mxu0 %v590
        %604 = vmatpush.bf16.msra.mxu0 %v589
        %605 = vmatpush.bf16.msra.mxu0 %v588
        %606 = vmatpush.bf16.msra.mxu0 %v587
        %607 = vmatpush.bf16.msra.mxu0 %v586
        %608 = vmatpush.bf16.msra.mxu0 %v585
        %609 = vmatmul.bf16.gmra.mxu0 %v546
        %v610 = vpop.f32.mrf.mxu0
        %v611 = vadd.f32 %v551, %v610
        %v612 = vpop.f32.mrf.mxu0
        %v613 = vadd.f32 %v551, %v612
        %614 = vmatmul.bf16.gmra.mxu0 %v547
        %v615 = vpop.f32.mrf.mxu0
        %v616 = vadd.f32 %v551, %v615
        %v617 = vpop.f32.mrf.mxu0
        %v618 = vadd.f32 %v551, %v617
        %619 = vmatmul.bf16.gmra.mxu0 %v548
        %v620 = vpop.f32.mrf.mxu0
        %v621 = vadd.f32 %v551, %v620
        %v622 = vpop.f32.mrf.mxu0
        %v623 = vadd.f32 %v551, %v622
        %624 = vmatmul.bf16.gmra.mxu0 %v549
        %v625 = vpop.f32.mrf.mxu0
        %v626 = vadd.f32 %v551, %v625
        %v627 = vpop.f32.mrf.mxu0
        %v628 = vadd.f32 %v551, %v627
        %629 = vdwg.mxu0
        %v630 = vadd.f32 %v423, %v611
        %v631 = vadd.f32 %v424, %v613
        %v632 = vadd.f32 %v425, %v616
        %v633 = vadd.f32 %v426, %v618
        %v634 = vadd.f32 %v427, %v621
        %v635 = vadd.f32 %v428, %v623
        %v636 = vadd.f32 %v429, %v626
        %v637 = vadd.f32 %v430, %v628
        %v638 = vld [vmem:[%s6] sm:$0xff]
        %v639 = vld [vmem:[%s6 + $0x8] sm:$0xff]
        %v640 = vld [vmem:[%s6 + $0x10] sm:$0xff]
        %v641 = vld [vmem:[%s6 + $0x18] sm:$0xff]
        %v642 = vld [vmem:[%s6 + $0x20] sm:$0xff]
        %v643 = vld [vmem:[%s6 + $0x28] sm:$0xff]
        %v644 = vld [vmem:[%s6 + $0x30] sm:$0xff]
        %v645 = vld [vmem:[%s6 + $0x38] sm:$0xff]
        %v646 = vld [vmem:[%s6 + $0x40] sm:$0xff]
        %v647 = vld [vmem:[%s6 + $0x48] sm:$0xff]
        %v648 = vld [vmem:[%s6 + $0x50] sm:$0xff]
        %v649 = vld [vmem:[%s6 + $0x58] sm:$0xff]
        %v650 = vld [vmem:[%s6 + $0x60] sm:$0xff]
        %v651 = vld [vmem:[%s6 + $0x68] sm:$0xff]
        %v652 = vld [vmem:[%s6 + $0x70] sm:$0xff]
        %v653 = vld [vmem:[%s6 + $0x78] sm:$0xff]
        %v654 = vld [vmem:[%s7] sm:$0x3]
        %v655 = vld [vmem:[%s8] sm:$0xf]
        %v656 = vld [vmem:[%s8 + $0x4] sm:$0xf]
        %v657 = vld [vmem:[%s8 + $0x8] sm:$0xf]
        %v658 = vld [vmem:[%s8 + $0xc] sm:$0xf]
        %v659 = vld [vmem:[%s8 + $0x10] sm:$0xf]
        %v660 = vld [vmem:[%s8 + $0x14] sm:$0xf]
        %v661 = vld [vmem:[%s8 + $0x18] sm:$0xf]
        %v662 = vld [vmem:[%s8 + $0x1c] sm:$0xf]
        %v663 = vld [vmem:[%s8 + $0x20] sm:$0xf]
        %v664 = vld [vmem:[%s8 + $0x24] sm:$0xf]
        %v665 = vld [vmem:[%s8 + $0x28] sm:$0xf]
        %v666 = vld [vmem:[%s8 + $0x2c] sm:$0xf]
        %v667 = vld [vmem:[%s8 + $0x30] sm:$0xf]
        %v668 = vld [vmem:[%s8 + $0x34] sm:$0xf]
        %v669 = vld [vmem:[%s8 + $0x38] sm:$0xf]
        %v670 = vld [vmem:[%s8 + $0x3c] sm:$0xf]
        %v671 = vld [vmem:[%s8 + $0x40] sm:$0xf]
        %v672 = vld [vmem:[%s8 + $0x44] sm:$0xf]
        %v673 = vld [vmem:[%s8 + $0x48] sm:$0xf]
        %v674 = vld [vmem:[%s8 + $0x4c] sm:$0xf]
        %v675 = vld [vmem:[%s8 + $0x50] sm:$0xf]
        %v676 = vld [vmem:[%s8 + $0x54] sm:$0xf]
        %v677 = vld [vmem:[%s8 + $0x58] sm:$0xf]
        %v678 = vld [vmem:[%s8 + $0x5c] sm:$0xf]
        %v679 = vld [vmem:[%s8 + $0x60] sm:$0xf]
        %v680 = vld [vmem:[%s8 + $0x64] sm:$0xf]
        %v681 = vld [vmem:[%s8 + $0x68] sm:$0xf]
        %v682 = vld [vmem:[%s8 + $0x6c] sm:$0xf]
        %v683 = vld [vmem:[%s8 + $0x70] sm:$0xf]
        %v684 = vld [vmem:[%s8 + $0x74] sm:$0xf]
        %v685 = vld [vmem:[%s8 + $0x78] sm:$0xf]
        %v686 = vld [vmem:[%s8 + $0x7c] sm:$0xf]
        %v687 = vld [vmem:[%s9] sm:$0x1]
        %v688 = vpack.c.bf16 %v631, %v630
        %v689 = vpack.c.bf16 %v633, %v632
        %v690 = vpack.c.bf16 %v635, %v634
        %v691 = vpack.c.bf16 %v637, %v636
        %v693 = vperm.slane %v654, 0
        %v694 = vperm.slane %v654, 1
        %v713 = vunpack.c.l.b16 %v638
        %v714 = vunpack.c.h.b16 %v638
        %v715 = vunpack.c.l.b16 %v639
        %v716 = vunpack.c.h.b16 %v639
        %v717 = vunpack.c.l.b16 %v640
        %v718 = vunpack.c.h.b16 %v640
        %v719 = vunpack.c.l.b16 %v641
        %v720 = vunpack.c.h.b16 %v641
        %v721 = vunpack.c.l.b16 %v642
        %v722 = vunpack.c.h.b16 %v642
        %v723 = vunpack.c.l.b16 %v643
        %v724 = vunpack.c.h.b16 %v643
        %v725 = vunpack.c.l.b16 %v644
        %v726 = vunpack.c.h.b16 %v644
        %v727 = vunpack.c.l.b16 %v645
        %v728 = vunpack.c.h.b16 %v645
        %v729 = vunpack.c.l.b16 %v646
        %v730 = vunpack.c.h.b16 %v646
        %v731 = vunpack.c.l.b16 %v647
        %v732 = vunpack.c.h.b16 %v647
        %v733 = vunpack.c.l.b16 %v648
        %v734 = vunpack.c.h.b16 %v648
        %v735 = vunpack.c.l.b16 %v649
        %v736 = vunpack.c.h.b16 %v649
        %v737 = vunpack.c.l.b16 %v650
        %v738 = vunpack.c.h.b16 %v650
        %v739 = vunpack.c.l.b16 %v651
        %v740 = vunpack.c.h.b16 %v651
        %v741 = vunpack.c.l.b16 %v652
        %v742 = vunpack.c.h.b16 %v652
        %v743 = vunpack.c.l.b16 %v653
        %v744 = vunpack.c.h.b16 %v653
        %v745 = vpack.c.b16 %v715, %v713
        %v746 = vpack.c.b16 %v716, %v714
        %v747 = vpack.c.b16 %v719, %v717
        %v748 = vpack.c.b16 %v720, %v718
        %v749 = vpack.c.b16 %v723, %v721
        %v750 = vpack.c.b16 %v724, %v722
        %v751 = vpack.c.b16 %v727, %v725
        %v752 = vpack.c.b16 %v728, %v726
        %v753 = vpack.c.b16 %v731, %v729
        %v754 = vpack.c.b16 %v732, %v730
        %v755 = vpack.c.b16 %v735, %v733
        %v756 = vpack.c.b16 %v736, %v734
        %v757 = vpack.c.b16 %v739, %v737
        %v758 = vpack.c.b16 %v740, %v738
        %v759 = vpack.c.b16 %v743, %v741
        %v760 = vpack.c.b16 %v744, %v742
        %777 = vmatpush.bf16.msra.mxu0 %v759
        %778 = vmatpush.bf16.msra.mxu0 %v757
        %779 = vmatpush.bf16.msra.mxu0 %v755
        %780 = vmatpush.bf16.msra.mxu0 %v753
        %781 = vmatpush.bf16.msra.mxu0 %v751
        %782 = vmatpush.bf16.msra.mxu0 %v749
        %783 = vmatpush.bf16.msra.mxu0 %v747
        %784 = vmatpush.bf16.msra.mxu0 %v745
        %785 = vmatmul.bf16.gmra.mxu0 %v688
        %v786 = vpop.f32.mrf.mxu0
        %v787 = vadd.f32 %v693, %v786
        %v788 = vpop.f32.mrf.mxu0
        %v789 = vadd.f32 %v693, %v788
        %790 = vmatmul.bf16.gmra.mxu0 %v689
        %v791 = vpop.f32.mrf.mxu0
        %v792 = vadd.f32 %v693, %v791
        %v793 = vpop.f32.mrf.mxu0
        %v794 = vadd.f32 %v693, %v793
        %795 = vmatmul.bf16.gmra.mxu0 %v690
        %v796 = vpop.f32.mrf.mxu0
        %v797 = vadd.f32 %v693, %v796
        %v798 = vpop.f32.mrf.mxu0
        %v799 = vadd.f32 %v693, %v798
        %800 = vmatmul.bf16.gmra.mxu0 %v691
        %v801 = vpop.f32.mrf.mxu0
        %v802 = vadd.f32 %v693, %v801
        %v803 = vpop.f32.mrf.mxu0
        %v804 = vadd.f32 %v693, %v803
        %805 = vdwg.mxu0
        %806 = vmatpush.bf16.msra.mxu0 %v760
        %807 = vmatpush.bf16.msra.mxu0 %v758
        %808 = vmatpush.bf16.msra.mxu0 %v756
        %809 = vmatpush.bf16.msra.mxu0 %v754
        %810 = vmatpush.bf16.msra.mxu0 %v752
        %811 = vmatpush.bf16.msra.mxu0 %v750
        %812 = vmatpush.bf16.msra.mxu0 %v748
        %813 = vmatpush.bf16.msra.mxu0 %v746
        %814 = vmatmul.bf16.gmra.mxu0 %v688
        %v815 = vpop.f32.mrf.mxu0
        %v816 = vadd.f32 %v694, %v815
        %v817 = vpop.f32.mrf.mxu0
        %v818 = vadd.f32 %v694, %v817
        %819 = vmatmul.bf16.gmra.mxu0 %v689
        %v820 = vpop.f32.mrf.mxu0
        %v821 = vadd.f32 %v694, %v820
        %v822 = vpop.f32.mrf.mxu0
        %v823 = vadd.f32 %v694, %v822
        %824 = vmatmul.bf16.gmra.mxu0 %v690
        %v825 = vpop.f32.mrf.mxu0
        %v826 = vadd.f32 %v694, %v825
        %v827 = vpop.f32.mrf.mxu0
        %v828 = vadd.f32 %v694, %v827
        %829 = vmatmul.bf16.gmra.mxu0 %v691
        %v830 = vpop.f32.mrf.mxu0
        %v831 = vadd.f32 %v694, %v830
        %v832 = vpop.f32.mrf.mxu0
        %v833 = vadd.f32 %v694, %v832
        %834 = vdwg.mxu0
        %v835 = vmax.f32 %v787, 0.0
        %v836 = vmax.f32 %v816, 0.0
        %v837 = vmax.f32 %v789, 0.0
        %v838 = vmax.f32 %v818, 0.0
        %v839 = vmax.f32 %v792, 0.0
        %v840 = vmax.f32 %v821, 0.0
        %v841 = vmax.f32 %v794, 0.0
        %v842 = vmax.f32 %v823, 0.0
        %v843 = vmax.f32 %v797, 0.0
        %v844 = vmax.f32 %v826, 0.0
        %v845 = vmax.f32 %v799, 0.0
        %v846 = vmax.f32 %v828, 0.0
        %v847 = vmax.f32 %v802, 0.0
        %v848 = vmax.f32 %v831, 0.0
        %v849 = vmax.f32 %v804, 0.0
        %v850 = vmax.f32 %v833, 0.0
        %v851 = vpack.c.bf16 %v837, %v835
        %v852 = vpack.c.bf16 %v838, %v836
        %v853 = vpack.c.bf16 %v841, %v839
        %v854 = vpack.c.bf16 %v842, %v840
        %v855 = vpack.c.bf16 %v845, %v843
        %v856 = vpack.c.bf16 %v846, %v844
        %v857 = vpack.c.bf16 %v849, %v847
        %v858 = vpack.c.bf16 %v850, %v848
        %v860 = vperm.slane %v687, 0
        %v894 = vunpack.c.l.b16 %v655
        %v895 = vunpack.c.l.b16 %v656
        %v896 = vunpack.c.l.b16 %v657
        %v897 = vunpack.c.l.b16 %v658
        %v898 = vunpack.c.l.b16 %v659
        %v899 = vunpack.c.l.b16 %v660
        %v900 = vunpack.c.l.b16 %v661
        %v901 = vunpack.c.l.b16 %v662
        %v902 = vunpack.c.l.b16 %v663
        %v903 = vunpack.c.l.b16 %v664
        %v904 = vunpack.c.l.b16 %v665
        %v905 = vunpack.c.l.b16 %v666
        %v906 = vunpack.c.l.b16 %v667
        %v907 = vunpack.c.l.b16 %v668
        %v908 = vunpack.c.l.b16 %v669
        %v909 = vunpack.c.l.b16 %v670
        %v910 = vunpack.c.l.b16 %v671
        %v911 = vunpack.c.l.b16 %v672
        %v912 = vunpack.c.l.b16 %v673
        %v913 = vunpack.c.l.b16 %v674
        %v914 = vunpack.c.l.b16 %v675
        %v915 = vunpack.c.l.b16 %v676
        %v916 = vunpack.c.l.b16 %v677
        %v917 = vunpack.c.l.b16 %v678
        %v918 = vunpack.c.l.b16 %v679
        %v919 = vunpack.c.l.b16 %v680
        %v920 = vunpack.c.l.b16 %v681
        %v921 = vunpack.c.l.b16 %v682
        %v922 = vunpack.c.l.b16 %v683
        %v923 = vunpack.c.l.b16 %v684
        %v924 = vunpack.c.l.b16 %v685
        %v925 = vunpack.c.l.b16 %v686
        %v926 = vpack.c.b16 %v895, %v894
        %v927 = vpack.c.b16 %v897, %v896
        %v928 = vpack.c.b16 %v899, %v898
        %v929 = vpack.c.b16 %v901, %v900
        %v930 = vpack.c.b16 %v903, %v902
        %v931 = vpack.c.b16 %v905, %v904
        %v932 = vpack.c.b16 %v907, %v906
        %v933 = vpack.c.b16 %v909, %v908
        %v934 = vpack.c.b16 %v911, %v910
        %v935 = vpack.c.b16 %v913, %v912
        %v936 = vpack.c.b16 %v915, %v914
        %v937 = vpack.c.b16 %v917, %v916
        %v938 = vpack.c.b16 %v919, %v918
        %v939 = vpack.c.b16 %v921, %v920
        %v940 = vpack.c.b16 %v923, %v922
        %v941 = vpack.c.b16 %v925, %v924
        %958 = vmatpush.bf16.msra.mxu0 %v933
        %959 = vmatpush.bf16.msra.mxu0 %v932
        %960 = vmatpush.bf16.msra.mxu0 %v931
        %961 = vmatpush.bf16.msra.mxu0 %v930
        %962 = vmatpush.bf16.msra.mxu0 %v929
        %963 = vmatpush.bf16.msra.mxu0 %v928
        %964 = vmatpush.bf16.msra.mxu0 %v927
        %965 = vmatpush.bf16.msra.mxu0 %v926
        %966 = vmatmul.bf16.gmra.mxu0 %v851
        %v967 = vpop.f32.mrf.mxu0
        %v968 = vadd.f32 %v860, %v967
        %v969 = vpop.f32.mrf.mxu0
        %v970 = vadd.f32 %v860, %v969
        %971 = vmatmul.bf16.gmra.mxu0 %v853
        %v972 = vpop.f32.mrf.mxu0
        %v973 = vadd.f32 %v860, %v972
        %v974 = vpop.f32.mrf.mxu0
        %v975 = vadd.f32 %v860, %v974
        %976 = vmatmul.bf16.gmra.mxu0 %v855
        %v977 = vpop.f32.mrf.mxu0
        %v978 = vadd.f32 %v860, %v977
        %v979 = vpop.f32.mrf.mxu0
        %v980 = vadd.f32 %v860, %v979
        %981 = vmatmul.bf16.gmra.mxu0 %v857
        %v982 = vpop.f32.mrf.mxu0
        %v983 = vadd.f32 %v860, %v982
        %v984 = vpop.f32.mrf.mxu0
        %v985 = vadd.f32 %v860, %v984
        %986 = vdwg.mxu0
        %987 = vmatpush.bf16.msra.mxu0 %v941
        %988 = vmatpush.bf16.msra.mxu0 %v940
        %989 = vmatpush.bf16.msra.mxu0 %v939
        %990 = vmatpush.bf16.msra.mxu0 %v938
        %991 = vmatpush.bf16.msra.mxu0 %v937
        %992 = vmatpush.bf16.msra.mxu0 %v936
        %993 = vmatpush.bf16.msra.mxu0 %v935
        %994 = vmatpush.bf16.msra.mxu0 %v934
        %995 = vmatmul.bf16.gmra.mxu0 %v852
        %v996 = vpop.f32.mrf.mxu0
        %v997 = vadd.f32 %v968, %v996
        %v998 = vpop.f32.mrf.mxu0
        %v999 = vadd.f32 %v970, %v998
        %1000 = vmatmul.bf16.gmra.mxu0 %v854
        %v1001 = vpop.f32.mrf.mxu0
        %v1002 = vadd.f32 %v973, %v1001
        %v1003 = vpop.f32.mrf.mxu0
        %v1004 = vadd.f32 %v975, %v1003
        %1005 = vmatmul.bf16.gmra.mxu0 %v856
        %v1006 = vpop.f32.mrf.mxu0
        %v1007 = vadd.f32 %v978, %v1006
        %v1008 = vpop.f32.mrf.mxu0
        %v1009 = vadd.f32 %v980, %v1008
        %1010 = vmatmul.bf16.gmra.mxu0 %v858
        %v1011 = vpop.f32.mrf.mxu0
        %v1012 = vadd.f32 %v983, %v1011
        %v1013 = vpop.f32.mrf.mxu0
        %v1014 = vadd.f32 %v985, %v1013
        %1015 = vdwg.mxu0
        %v1016 = vmul.f32 %v997, 0.5
        %v1017 = vmul.f32 %v999, 0.5
        %v1018 = vmul.f32 %v1002, 0.5
        %v1019 = vmul.f32 %v1004, 0.5
        %v1020 = vmul.f32 %v1007, 0.5
        %v1021 = vmul.f32 %v1009, 0.5
        %v1022 = vmul.f32 %v1012, 0.5
        %v1023 = vmul.f32 %v1014, 0.5
        %v1024 = vtanh.pop %v1016
        %v1025 = vtanh.pop %v1017
        %v1026 = vtanh.pop %v1018
        %v1027 = vtanh.pop %v1019
        %v1028 = vtanh.pop %v1020
        %v1029 = vtanh.pop %v1021
        %v1030 = vtanh.pop %v1022
        %v1031 = vtanh.pop %v1023
        %v1032 = vmul.f32 %v1024, 2.0
        %v1033 = vmul.f32 %v1025, 2.0
        %v1034 = vmul.f32 %v1026, 2.0
        %v1035 = vmul.f32 %v1027, 2.0
        %v1036 = vmul.f32 %v1028, 2.0
        %v1037 = vmul.f32 %v1029, 2.0
        %v1038 = vmul.f32 %v1030, 2.0
        %v1039 = vmul.f32 %v1031, 2.0
        %v1040 = vmul.f32 %v1032, 1.442695
        %v1041 = vpow.pop %v1040
        %v1042 = vmul.f32 %v1033, 1.442695
        %v1043 = vpow.pop %v1042
        %v1044 = vmul.f32 %v1034, 1.442695
        %v1045 = vpow.pop %v1044
        %v1046 = vmul.f32 %v1035, 1.442695
        %v1047 = vpow.pop %v1046
        %v1048 = vmul.f32 %v1036, 1.442695
        %v1049 = vpow.pop %v1048
        %v1050 = vmul.f32 %v1037, 1.442695
        %v1051 = vpow.pop %v1050
        %v1052 = vmul.f32 %v1038, 1.442695
        %v1053 = vpow.pop %v1052
        %v1054 = vmul.f32 %v1039, 1.442695
        %v1055 = vpow.pop %v1054
        %v1056 = vmul.f32 %v1041, %v431
        %v1057 = vmul.f32 %v1043, %v432
        %v1058 = vmul.f32 %v1045, %v433
        %v1059 = vmul.f32 %v1047, %v434
        %v1060 = vmul.f32 %v1049, %v435
        %v1061 = vmul.f32 %v1051, %v436
        %v1062 = vmul.f32 %v1053, %v437
        %v1063 = vmul.f32 %v1055, %v438
        %1072 = vrot.lane.b32.xlu0 %v997, 64
        %v1073 = vpop.permute.xlu0 %1072
        %1074 = vrot.lane.b32.xlu0 %v999, 64
        %v1075 = vpop.permute.xlu0 %1074
        %1076 = vrot.lane.b32.xlu0 %v1002, 64
        %v1077 = vpop.permute.xlu0 %1076
        %1078 = vrot.lane.b32.xlu0 %v1004, 64
        %v1079 = vpop.permute.xlu0 %1078
        %1080 = vrot.lane.b32.xlu0 %v1007, 64
        %v1081 = vpop.permute.xlu0 %1080
        %1082 = vrot.lane.b32.xlu0 %v1009, 64
        %v1083 = vpop.permute.xlu0 %1082
        %1084 = vrot.lane.b32.xlu0 %v1012, 64
        %v1085 = vpop.permute.xlu0 %1084
        %1086 = vrot.lane.b32.xlu0 %v1014, 64
        %v1087 = vpop.permute.xlu0 %1086
        %v1096 = vadd.f32 %v1056, %v1073
        %v1097 = vadd.f32 %v1057, %v1075
        %v1098 = vadd.f32 %v1058, %v1077
        %v1099 = vadd.f32 %v1059, %v1079
        %v1100 = vadd.f32 %v1060, %v1081
        %v1101 = vadd.f32 %v1061, %v1083
        %v1102 = vadd.f32 %v1062, %v1085
        %v1103 = vadd.f32 %v1063, %v1087
        %1104 = vst [vmem:[%s400] sm:$0xff] %v630
        %1105 = vst [vmem:[%s400 + $0x8] sm:$0xff] %v631
        %1106 = vst [vmem:[%s400 + $0x10] sm:$0xff] %v632
        %1107 = vst [vmem:[%s400 + $0x18] sm:$0xff] %v633
        %1108 = vst [vmem:[%s400 + $0x20] sm:$0xff] %v634
        %1109 = vst [vmem:[%s400 + $0x28] sm:$0xff] %v635
        %1110 = vst [vmem:[%s400 + $0x30] sm:$0xff] %v636
        %1111 = vst [vmem:[%s400 + $0x38] sm:$0xff] %v637
        %1112 = vst.msk [vmem:[%s407] sm:$0xff] %vm496, %v1096
        %1113 = vst.msk [vmem:[%s407 + $0x8] sm:$0xff] %vm496, %v1097
        %1114 = vst.msk [vmem:[%s407 + $0x10] sm:$0xff] %vm496, %v1098
        %1115 = vst.msk [vmem:[%s407 + $0x18] sm:$0xff] %vm496, %v1099
        %1116 = vst.msk [vmem:[%s407 + $0x20] sm:$0xff] %vm496, %v1100
        %1117 = vst.msk [vmem:[%s407 + $0x28] sm:$0xff] %vm496, %v1101
        %1118 = vst.msk [vmem:[%s407 + $0x30] sm:$0xff] %vm496, %v1102
        %1119 = vst.msk [vmem:[%s407 + $0x38] sm:$0xff] %vm496, %v1103
        %s1120 = sand.u32 %s257, 1
        %s1121 = scalar_lea.sflag [#allocation3], %s1120
        %s1122 = sand.u32 %s257, 1
        %s1123 = smul.addr %s1122, 64
        %s1124 = scalar_lea.vmem [#allocation2], %s1123
        %s1125 = sand.u32 %s283, 1
        %s1126 = scalar_lea.sflag [#allocation5], %s1125
        %s1127 = sand.u32 %s283, 1
        %s1128 = smul.addr %s1127, 64
        %s1129 = scalar_lea.vmem [#allocation4], %s1128
        // Predicated region
        $region61: #{_lambda_.1} parent=59 // pred_check
          %p1130 = pneg %p267
        $region62: #{_lambda_.1} parent=59 // pred_check_branch
          %1132 = sbr.rel (%p1130) target = $region64
        $region63: #{_lambda_.1} parent=59 // pred_region
          %s1133 = smul.u32 8, %s29
          %1135 = vsyncadd %s1121, 0
          %s1136 = smul.addr %s1133, 8
          %s1137 = scalar_lea.hbm %s10, %s1136
          %s1138 = sshll.u32 %s1124, 4
          %s1139 = int_to_ptr.vmem [resolvable:$true] %s1138
          %s1140 = sshll.u32 %s1137, 4
          %s1141 = int_to_ptr.hbm [resolvable:$true] %s1140
          %1146 = dma.vmem_to_hbm [thread:$0]  %s1139, 1024, %s1141, %s1121, 128, 128, 8
        $region64: #{_lambda_.1} parent=59 // pred_fallthru
          _
        // Predicated region
        $region65: #{_lambda_.1} parent=59 // pred_check
          %p1147 = pneg %p293
        $region66: #{_lambda_.1} parent=59 // pred_check_branch
          %1149 = sbr.rel (%p1147) target = $region68
        $region67: #{_lambda_.1} parent=59 // pred_region
          %s1150 = smul.u32 8, %s29
          %1152 = vsyncadd %s1126, 0
          %s1153 = smul.addr %s1150, 8
          %s1154 = scalar_lea.hbm %s11, %s1153
          %s1155 = sshll.u32 %s1129, 4
          %s1156 = int_to_ptr.vmem [resolvable:$true] %s1155
          %s1157 = sshll.u32 %s1154, 4
          %s1158 = int_to_ptr.hbm [resolvable:$true] %s1157
          %1163 = dma.vmem_to_hbm [thread:$0]  %s1156, 1024, %s1158, %s1126, 128, 128, 8
        $region68: #{_lambda_.1} parent=59 // pred_fallthru
          _
      $region60: #{_lambda_.1} parent=5 // pred_fallthru
        _
      %p1164 = scmp.le.s32.totalorder 2, %s24
      // Predicated region
      $region69: #{_lambda_.1} parent=5 // pred_check
        %p1165 = pneg %p1164
      $region70: #{_lambda_.1} parent=5 // pred_check_branch
        %1167 = sbr.rel (%p1165) target = $region72
      $region71: #{_lambda_.1} parent=5 // pred_region
        %s1168 = ssub.s32 %s24, 2
        // Predicated region
        $region73: #{_lambda_.1} parent=71 // pred_check
          %p1169 = pneg %p273
        $region74: #{_lambda_.1} parent=71 // pred_check_branch
          %1171 = sbr.rel (%p1169) target = $region76
        $region75: #{_lambda_.1} parent=71 // pred_region
          %s1172 = sand.u32 %s258, 1
          %s1173 = scalar_lea.sflag [#allocation3], %s1172
          %s1174 = sand.u32 %s258, 1
          %s1175 = smul.addr %s1174, 64
          %s1176 = scalar_lea.vmem [#allocation2], %s1175
          %1178 = dma.done %s1173, 1024
        $region76: #{_lambda_.1} parent=71 // pred_fallthru
          _
        // Predicated region
        $region77: #{_lambda_.1} parent=71 // pred_check
          %p1179 = pneg %p299
        $region78: #{_lambda_.1} parent=71 // pred_check_branch
          %1181 = sbr.rel (%p1179) target = $region80
        $region79: #{_lambda_.1} parent=71 // pred_region
          %s1182 = sand.u32 %s284, 1
          %s1183 = scalar_lea.sflag [#allocation5], %s1182
          %s1184 = sand.u32 %s284, 1
          %s1185 = smul.addr %s1184, 64
          %s1186 = scalar_lea.vmem [#allocation4], %s1185
          %1188 = dma.done %s1183, 1024
        $region80: #{_lambda_.1} parent=71 // pred_fallthru
          _
      $region72: #{_lambda_.1} parent=5 // pred_fallthru
        _
    $region6: #{_lambda_.1} parent=1 // loop_footer
      %s28 = sadd.s32 1, %s24
    $region7: #{_lambda_.1} parent=1 // loop_footer_branch
      %23 = sbr.rel target = $region3
    $region8: #{_lambda_.1} parent=1 // loop_exit
      _
    %1189 = vsyncpa [#allocation3], 1
    %s1190 = scalar_lea.sflag [#allocation3], 1
    %1191 = vsyncpa %s1190, 1
    %1192 = vsyncpa [#allocation5], 1
    %s1193 = scalar_lea.sflag [#allocation5], 1
    %1194 = vsyncpa %s1193, 1

</llo_original>
